<compile_context>
chip_gen: v7x
topology: tpu7x:2x2x1
jax: 0.10.0
libtpu: 0.0.40
codegen_flags: <defaults>
</compile_context>

<pallas_src>
import functools

import jax
import jax.numpy as jnp
from jax.experimental import pallas as pl
from jax.experimental.pallas import tpu as pltpu


def _batch_sub2ind_kernel(row_ref, col_ref, out_ref, *, width, plane):
    # Batch index comes from the grid; its offset is a cheap scalar add that the
    # VPU fuses into the elementwise expression.
    b = pl.program_id(0)
    offset = (b * plane).astype(out_ref.dtype)
    out_ref[...] = row_ref[...] * width + col_ref[...] + offset


def _choose_tile_h(height_rows, width_cols, itemsize=4, target_block_bytes=2 << 20):
    """Largest row-tile (multiple of 8, or full extent) under ~2 MiB per block."""
    if height_rows * width_cols * itemsize <= target_block_bytes:
        return height_rows
    tile = (target_block_bytes // (width_cols * itemsize)) // 8 * 8
    return int(max(8, min(tile, height_rows)))


def batch_sub2ind(shape, row_sub, col_sub, dtype=jnp.int32):
    """Pallas equivalent of BatchSub2Ind.forward(shape, row_sub, col_sub).

    shape: (height, width) of the indexed volume.
    row_sub, col_sub: integer subscripts of shape (B, H, W).
    Returns int32 linear indices of shape (B, H, W).
    """
    height, width = int(shape[0]), int(shape[1])
    assert row_sub.shape == col_sub.shape and row_sub.ndim == 3
    B, H, W = row_sub.shape

    row_sub = row_sub.astype(dtype)
    col_sub = col_sub.astype(dtype)

    tile_h = _choose_tile_h(H, W)
    grid = (B, pl.cdiv(H, tile_h))

    # Batch dim is squeezed out of the kernel view (None) -> kernel sees the
    # native 2-D (sublane, lane) tile of shape (tile_h, W).  tile_h is a
    # multiple of 8 (or the full H) and the last block dim equals the full W,
    # satisfying the (8, 128) tiling rule for any W.
    spec = pl.BlockSpec((None, tile_h, W), lambda b, h: (b, h, 0))

    kernel = functools.partial(
        _batch_sub2ind_kernel, width=width, plane=height * width
    )

    return pl.pallas_call(
        kernel,
        out_shape=jax.ShapeDtypeStruct((B, H, W), dtype),
        grid=grid,
        in_specs=[spec, spec],
        out_specs=spec,
        compiler_params=pltpu.CompilerParams(
            # Both axes are independent -> shard across v7x's 2 TensorCores.
            dimension_semantics=("parallel", "parallel"),
            # Explicit headroom; safe on v5e/v6e (128 MiB phys) and v7x (64 MiB).
            vmem_limit_bytes=32 * 1024 * 1024,
        ),
    )(row_sub, col_sub)
    # TODO(synk): the PyTorch `out=` in-place variant has no functional JAX
    # equivalent; callers should use the returned array (or input_output_aliases
    # if writing into a preallocated buffer is required).


if __name__ == "__main__":
    key = jax.random.PRNGKey(0)
    k_row, k_col = jax.random.split(key)

    batch, height, width = 2, 16, 16
    n_rows, n_cols = 8, 16  # shape of the subscript grids per batch

    row_sub = jax.random.randint(
        k_row, (batch, n_rows, n_cols), minval=0, maxval=height, dtype=jnp.int32
    )
    col_sub = jax.random.randint(
        k_col, (batch, n_rows, n_cols), minval=0, maxval=width, dtype=jnp.int32
    )

    ind = batch_sub2ind((height, width), row_sub, col_sub)
    jax.block_until_ready(ind)

    # Reference: plain-JAX transcription of the PyTorch module.
    offsets = (jnp.arange(batch, dtype=jnp.int32) * (height * width)).reshape(-1, 1, 1)
    ref = row_sub * width + col_sub + offsets

    assert ind.shape == (batch, n_rows, n_cols)
    assert ind.dtype == jnp.int32
    assert jnp.array_equal(ind, ref), "batch_sub2ind mismatch"

    print("KERNEL_OK")
</pallas_src>

<mosaic_0001>
module attributes {stable_mosaic.version = 11 : i64} {
  func.func @_batch_sub2ind_kernel(%arg0: i32, %arg1: i32, %arg2: memref<1x8x16xi32, #tpu.memory_space<vmem>>, %arg3: memref<1x8x16xi32, #tpu.memory_space<vmem>>, %arg4: memref<1x8x16xi32, #tpu.memory_space<vmem>>) attributes {dimension_semantics = [#tpu.dimension_semantics<parallel>, #tpu.dimension_semantics<parallel>], iteration_bounds = array<i64: 2, 1>, scalar_prefetch = 0 : i64, scratch_operands = 0 : i64, tpu.core_type = #tpu.core_type<tc>, window_params = [{transform_indices = @transform_0, window_bounds = array<i64: 1, 8, 16>}, {transform_indices = @transform_1, window_bounds = array<i64: 1, 8, 16>}, {transform_indices = @transform_2, window_bounds = array<i64: 1, 8, 16>}]} {
    %c256_i32 = arith.constant 256 : i32
    %0 = arith.muli %arg0, %c256_i32 : i32
    %c0 = arith.constant 0 : index
    %c0_0 = arith.constant 0 : index
    %c0_1 = arith.constant 0 : index
    %1 = vector.load %arg2[%c0, %c0_0, %c0_1] : memref<1x8x16xi32, #tpu.memory_space<vmem>>, vector<1x8x16xi32>
    %2 = vector.shape_cast %1 : vector<1x8x16xi32> to vector<8x16xi32>
    %c16_i32 = arith.constant 16 : i32
    %3 = vector.broadcast %c16_i32 : i32 to vector<8x16xi32>
    %4 = arith.muli %2, %3 : vector<8x16xi32>
    %c0_2 = arith.constant 0 : index
    %c0_3 = arith.constant 0 : index
    %c0_4 = arith.constant 0 : index
    %5 = vector.load %arg3[%c0_2, %c0_3, %c0_4] : memref<1x8x16xi32, #tpu.memory_space<vmem>>, vector<1x8x16xi32>
    %6 = vector.shape_cast %5 : vector<1x8x16xi32> to vector<8x16xi32>
    %7 = arith.addi %4, %6 : vector<8x16xi32>
    %8 = vector.broadcast %0 : i32 to vector<8x16xi32>
    %9 = arith.addi %7, %8 : vector<8x16xi32>
    %c0_5 = arith.constant 0 : index
    %c0_6 = arith.constant 0 : index
    %c0_7 = arith.constant 0 : index
    %10 = vector.load %arg4[%c0_5, %c0_6, %c0_7] : memref<1x8x16xi32, #tpu.memory_space<vmem>>, vector<1x8x16xi32>
    %11 = vector.shape_cast %10 : vector<1x8x16xi32> to vector<8x16xi32>
    %12 = vector.shape_cast %9 : vector<8x16xi32> to vector<1x8x16xi32>
    tpu.vector_store %arg4[%c0_5, %c0_6, %c0_7], %12 {strides = array<i32>} : memref<1x8x16xi32, #tpu.memory_space<vmem>>, vector<1x8x16xi32>,
    return
  }
  func.func @transform_0(%arg0: i32, %arg1: i32) -> (i32, i32, i32) {
    %c0_i32 = arith.constant 0 : i32
    %c0_i32_0 = arith.constant 0 : i32
    return %arg0, %arg1, %c0_i32 : i32, i32, i32
  }
  func.func @transform_1(%arg0: i32, %arg1: i32) -> (i32, i32, i32) {
    %c0_i32 = arith.constant 0 : i32
    %c0_i32_0 = arith.constant 0 : i32
    return %arg0, %arg1, %c0_i32 : i32, i32, i32
  }
  func.func @transform_2(%arg0: i32, %arg1: i32) -> (i32, i32, i32) {
    %c0_i32 = arith.constant 0 : i32
    %c0_i32_0 = arith.constant 0 : i32
    return %arg0, %arg1, %c0_i32 : i32, i32, i32
  }
}

</mosaic_0001>

<llo_original>
// kernel: tpu_custom_call.1
$region0: #{tpu_custom_call.1}
  #allocation0 [shape = 'u32[]', space=smem, size = 0x4, offset = 0x4, fixed_abs, tag = 'smem constant byte address 0x4 - core index']
  #allocation1 [shape = 'u32[144,128]{1,0:T(1,128)}', space=vmem, size = 0x12000, scoped, tag = 'internal scratch']
  %s0 = inlined_call_operand.hbm [shape: s32[2,8,16], index: 0, kind: input, shape index: {}]
  %s1 = inlined_call_operand.hbm [shape: s32[2,8,16], index: 1, kind: input, shape index: {}]
  %s2 = inlined_call_operand.hbm [shape: s32[2,8,16], index: 2, kind: output, shape index: {}]
  %s3 = sld [smem:[#allocation0]]
  $region49: #{tpu_custom_call.1} parent=0
    _
  %s5 = ssub.s32 1, %s3
  %s6 = scalar_select 0, %s5, %s3
  $region1: #{tpu_custom_call.1} parent=0
    #allocation2 [shape = 'u8[8192]{0}', space=vmem, size = 0x2000, scoped, tag = 'input window, operand 0']
    #allocation3 [shape = 's32[2]{0}', space=sflag, size = 0x8, scoped, tag = 'scoped memory for tpu_custom_call.1']
    #allocation4 [shape = 's32[2]{0}', space=sflag, size = 0x8, scoped, tag = 'scoped memory for tpu_custom_call.1']
    #allocation5 [shape = 'u8[8192]{0}', space=vmem, size = 0x2000, scoped, tag = 'input window, operand 1']
    #allocation6 [shape = 's32[2]{0}', space=sflag, size = 0x8, scoped, tag = 'scoped memory for tpu_custom_call.1']
    #allocation7 [shape = 'u8[8192]{0}', space=vmem, size = 0x2000, scoped, tag = 'output window, operand 0']
    %7 = vsyncpa [#allocation3], 0
    %s8 = scalar_lea.sflag [#allocation3], 1
    %9 = vsyncpa %s8, 0
    %10 = vsyncpa [#allocation6], 0
    %s11 = scalar_lea.sflag [#allocation6], 1
    %12 = vsyncpa %s11, 0
    %13 = vsyncpa [#allocation4], 0
    %s14 = scalar_lea.sflag [#allocation4], 1
    %15 = vsyncpa %s14, 0
    loop: start=0, step=1, limit=4
    $region2: #{tpu_custom_call.1} parent=1 // loop_pre_header
      _
    $region3: #{tpu_custom_call.1} parent=1 // loop_header
      %s17 = sphi 0, %s21
      %p18 = scmp.ge.s32.totalorder %s17, 4
      %s24 = sphi 0, %s36
      %s25 = sphi 0, %s32
      %s26 = sphi 0, %s24
      %s27 = sphi 0, %s25
      %s28 = sphi 0, %s26
      %s29 = sphi 0, %s27
      %s41 = sphi 0, %s43
      %s44 = sphi 0, %s41
      %s45 = sphi 0, %s44
      %s61 = sphi 0, %s45
      %s69 = sphi 0, %s71
      %s72 = sphi 0, %s69
      %s73 = sphi 0, %s72
      %s89 = sphi 0, %s73
      %s97 = sphi 0, %s99
      %s100 = sphi 0, %s97
      %s101 = sphi 0, %s100
      %s117 = sphi 0, %s101
    $region4: #{tpu_custom_call.1} parent=1 // loop_header_branch
      %20 = sbr.rel (%p18) target = $region8
    $region5: #{tpu_custom_call.1} parent=1 // loop_body
      %s22 = ssub.s32 %s17, 1
      %s23 = ssub.s32 %s17, 2
      %s30 = sadd.s32 1, %s25
      %p31 = scmp.ge.s32.totalorder %s30, 1
      %s32 = scalar_select %p31, 0, %s30
      %s33 = sadd.s32 1, %s24
      %s34 = scalar_select %p31, %s33, %s24
      %p35 = scmp.ge.s32.totalorder %s34, 2
      %s36 = scalar_select %p35, 0, %s34
      %s37 = ssub.s32 %s24, %s36
      %s38 = ssub.s32 %s25, %s32
      %s39 = sor.u32 %s37, %s38
      %p40 = scmp.eq.s32.totalorder %s39, 0
      %s42 = sadd.s32 %s41, 1
      %s43 = scalar_select %p40, %s41, %s42
      %p46 = pneg %p40
      %p47 = scmp.eq.s32.totalorder %s17, 1
      %p48 = por %p46, %p47
      %p49 = scmp.ne.s32.totalorder %s41, %s44
      %p50 = scmp.eq.s32.totalorder %s17, 0
      %p51 = por %p49, %p50
      %p52 = scmp.ne.s32.totalorder %s41, %s44
      %p53 = scmp.eq.s32.totalorder %s22, 1
      %p54 = por %p52, %p53
      %p55 = scmp.ne.s32.totalorder %s44, %s45
      %p56 = scmp.eq.s32.totalorder %s22, 0
      %p57 = por %p55, %p56
      %p58 = scmp.ne.s32.totalorder %s44, %s45
      %p59 = scmp.eq.s32.totalorder %s23, 1
      %p60 = por %p58, %p59
      %p62 = scmp.ne.s32.totalorder %s45, %s61
      %p63 = scmp.eq.s32.totalorder %s23, 0
      %p64 = por %p62, %p63
      %s65 = ssub.s32 %s24, %s36
      %s66 = ssub.s32 %s25, %s32
      %s67 = sor.u32 %s65, %s66
      %p68 = scmp.eq.s32.totalorder %s67, 0
      %s70 = sadd.s32 %s69, 1
      %s71 = scalar_select %p68, %s69, %s70
      %p74 = pneg %p68
      %p75 = scmp.eq.s32.totalorder %s17, 1
      %p76 = por %p74, %p75
      %p77 = scmp.ne.s32.totalorder %s69, %s72
      %p78 = scmp.eq.s32.totalorder %s17, 0
      %p79 = por %p77, %p78
      %p80 = scmp.ne.s32.totalorder %s69, %s72
      %p81 = scmp.eq.s32.totalorder %s22, 1
      %p82 = por %p80, %p81
      %p83 = scmp.ne.s32.totalorder %s72, %s73
      %p84 = scmp.eq.s32.totalorder %s22, 0
      %p85 = por %p83, %p84
      %p86 = scmp.ne.s32.totalorder %s72, %s73
      %p87 = scmp.eq.s32.totalorder %s23, 1
      %p88 = por %p86, %p87
      %p90 = scmp.ne.s32.totalorder %s73, %s89
      %p91 = scmp.eq.s32.totalorder %s23, 0
      %p92 = por %p90, %p91
      %s93 = ssub.s32 %s24, %s36
      %s94 = ssub.s32 %s25, %s32
      %s95 = sor.u32 %s93, %s94
      %p96 = scmp.eq.s32.totalorder %s95, 0
      %s98 = sadd.s32 %s97, 1
      %s99 = scalar_select %p96, %s97, %s98
      %p102 = pneg %p96
      %p103 = scmp.eq.s32.totalorder %s17, 1
      %p104 = por %p102, %p103
      %p105 = scmp.ne.s32.totalorder %s97, %s100
      %p106 = scmp.eq.s32.totalorder %s17, 0
      %p107 = por %p105, %p106
      %p108 = scmp.ne.s32.totalorder %s97, %s100
      %p109 = scmp.eq.s32.totalorder %s22, 1
      %p110 = por %p108, %p109
      %p111 = scmp.ne.s32.totalorder %s100, %s101
      %p112 = scmp.eq.s32.totalorder %s22, 0
      %p113 = por %p111, %p112
      %p114 = scmp.ne.s32.totalorder %s100, %s101
      %p115 = scmp.eq.s32.totalorder %s23, 1
      %p116 = por %p114, %p115
      %p118 = scmp.ne.s32.totalorder %s101, %s117
      %p119 = scmp.eq.s32.totalorder %s23, 0
      %p120 = por %p118, %p119
      %p121 = scmp.le.s32.totalorder 1, %s17
      %p122 = scmp.lt.s32.totalorder %s17, 3
      %p123 = pnand %p121, %p122
      %p124 = pneg %p123
      // Predicated region
      $region9: #{tpu_custom_call.1} parent=5 // pred_check
        _
      $region10: #{tpu_custom_call.1} parent=5 // pred_check_branch
        %126 = sbr.rel (%p123) target = $region12
      $region11: #{tpu_custom_call.1} parent=5 // pred_region
        %s127 = ssub.s32 %s17, 1
      $region12: #{tpu_custom_call.1} parent=5 // pred_fallthru
        _
      %p128 = scmp.lt.s32.totalorder %s17, 2
      // Predicated region
      $region13: #{tpu_custom_call.1} parent=5 // pred_check
        %p129 = pneg %p128
      $region14: #{tpu_custom_call.1} parent=5 // pred_check_branch
        %131 = sbr.rel (%p129) target = $region16
      $region15: #{tpu_custom_call.1} parent=5 // pred_region
        // Predicated region
        $region17: #{tpu_custom_call.1} parent=15 // pred_check
          %p132 = pneg %p51
        $region18: #{tpu_custom_call.1} parent=15 // pred_check_branch
          %134 = sbr.rel (%p132) target = $region20
        $region19: #{tpu_custom_call.1} parent=15 // pred_region
          %s135 = sand.u32 %s41, 1
          %s136 = scalar_lea.sflag [#allocation3], %s135
          %s137 = sand.u32 %s41, 1
          %s138 = smul.addr %s137, 8
          %s139 = scalar_lea.vmem [#allocation2], %s138
          %s141 = ssub.s32 128, 128
          %142 = vsyncadd %s136, %s141
          %s143 = sadd.s32 %s25, %s24
          %s144 = smul.addr %s143, 128
          %s145 = scalar_lea.hbm %s0, %s144
          %s147 = sshll.u32 %s139, 4
          %s148 = int_to_ptr.vmem [resolvable:$true] %s147
          %150 = dma.hbm_to_vmem [thread:$0]  %s145, 128, %s148, %s136
        $region20: #{tpu_custom_call.1} parent=15 // pred_fallthru
          _
        // Predicated region
        $region21: #{tpu_custom_call.1} parent=15 // pred_check
          %p151 = pneg %p79
        $region22: #{tpu_custom_call.1} parent=15 // pred_check_branch
          %153 = sbr.rel (%p151) target = $region24
        $region23: #{tpu_custom_call.1} parent=15 // pred_region
          %s154 = sand.u32 %s69, 1
          %s155 = scalar_lea.sflag [#allocation6], %s154
          %s156 = sand.u32 %s69, 1
          %s157 = smul.addr %s156, 8
          %s158 = scalar_lea.vmem [#allocation5], %s157
          %s160 = ssub.s32 128, 128
          %161 = vsyncadd %s155, %s160
          %s162 = sadd.s32 %s25, %s24
          %s163 = smul.addr %s162, 128
          %s164 = scalar_lea.hbm %s1, %s163
          %s166 = sshll.u32 %s158, 4
          %s167 = int_to_ptr.vmem [resolvable:$true] %s166
          %169 = dma.hbm_to_vmem [thread:$0]  %s164, 128, %s167, %s155
        $region24: #{tpu_custom_call.1} parent=15 // pred_fallthru
          _
      $region16: #{tpu_custom_call.1} parent=5 // pred_fallthru
        _
      %p170 = scmp.le.s32.totalorder 1, %s17
      %p171 = scmp.lt.s32.totalorder %s17, 3
      %p172 = pnand %p170, %p171
      %p173 = pneg %p172
      // Predicated region
      $region25: #{tpu_custom_call.1} parent=5 // pred_check
        _
      $region26: #{tpu_custom_call.1} parent=5 // pred_check_branch
        %175 = sbr.rel (%p172) target = $region28
      $region27: #{tpu_custom_call.1} parent=5 // pred_region
        %s176 = ssub.s32 %s17, 1
        %s177 = sand.u32 %s44, 1
        %s178 = scalar_lea.sflag [#allocation3], %s177
        %s179 = sand.u32 %s44, 1
        %s180 = smul.addr %s179, 8
        %s181 = scalar_lea.vmem [#allocation2], %s180
        // Predicated region
        $region29: #{tpu_custom_call.1} parent=27 // pred_check
          %p182 = pneg %p57
        $region30: #{tpu_custom_call.1} parent=27 // pred_check_branch
          %184 = sbr.rel (%p182) target = $region32
        $region31: #{tpu_custom_call.1} parent=27 // pred_region
          %185 = dma.done %s178, 128
        $region32: #{tpu_custom_call.1} parent=27 // pred_fallthru
          _
        %s186 = sand.u32 %s72, 1
        %s187 = scalar_lea.sflag [#allocation6], %s186
        %s188 = sand.u32 %s72, 1
        %s189 = smul.addr %s188, 8
        %s190 = scalar_lea.vmem [#allocation5], %s189
        // Predicated region
        $region33: #{tpu_custom_call.1} parent=27 // pred_check
          %p191 = pneg %p85
        $region34: #{tpu_custom_call.1} parent=27 // pred_check_branch
          %193 = sbr.rel (%p191) target = $region36
        $region35: #{tpu_custom_call.1} parent=27 // pred_region
          %194 = dma.done %s187, 128
        $region36: #{tpu_custom_call.1} parent=27 // pred_fallthru
          _
        %s195 = sand.u32 %s44, 1
        %s196 = scalar_lea.sflag [#allocation3], %s195
        %s197 = sand.u32 %s44, 1
        %s198 = smul.addr %s197, 8
        %s199 = scalar_lea.vmem [#allocation2], %s198
        %p200 = pneg %p57
        %p201 = pneg %p54
        %s202 = sand.u32 %s72, 1
        %s203 = scalar_lea.sflag [#allocation6], %s202
        %s204 = sand.u32 %s72, 1
        %s205 = smul.addr %s204, 8
        %s206 = scalar_lea.vmem [#allocation5], %s205
        %p207 = pneg %p85
        %p208 = pneg %p82
        %p209 = pneg %p113
        %p210 = pneg %p110
        %s211 = sand.u32 %s100, 1
        %s212 = scalar_lea.sflag [#allocation4], %s211
        %s213 = sand.u32 %s100, 1
        %s214 = smul.addr %s213, 8
        %s215 = scalar_lea.vmem [#allocation7], %s214
        %s216 = smul.u32 %s26, 256
        %v217 = vld [vmem:[%s181] sm:$0xff]
        %v218 = vmul.u32 %v217, 16
        %v219 = vld [vmem:[%s190] sm:$0xff]
        %v220 = vadd.s32 %v218, %v219
        %v221 = vstv %s216
        %v222 = vadd.s32 %v220, %v221
        %vm223 = vcmask 130048
        %224 = vst.msk [vmem:[%s215] sm:$0xff] %vm223, %v222
        %s225 = sand.u32 %s100, 1
        %s226 = scalar_lea.sflag [#allocation4], %s225
        %s227 = sand.u32 %s100, 1
        %s228 = smul.addr %s227, 8
        %s229 = scalar_lea.vmem [#allocation7], %s228
        // Predicated region
        $region37: #{tpu_custom_call.1} parent=27 // pred_check
          %p230 = pneg %p110
        $region38: #{tpu_custom_call.1} parent=27 // pred_check_branch
          %232 = sbr.rel (%p230) target = $region40
        $region39: #{tpu_custom_call.1} parent=27 // pred_region
          %s234 = ssub.s32 128, 128
          %235 = vsyncadd %s226, %s234
          %s236 = sadd.s32 %s27, %s26
          %s237 = smul.addr %s236, 128
          %s238 = scalar_lea.hbm %s2, %s237
          %s240 = sshll.u32 %s229, 4
          %s241 = int_to_ptr.vmem [resolvable:$true] %s240
          %243 = dma.vmem_to_hbm [thread:$0]  %s241, 128, %s238, %s226
        $region40: #{tpu_custom_call.1} parent=27 // pred_fallthru
          _
      $region28: #{tpu_custom_call.1} parent=5 // pred_fallthru
        _
      %p244 = scmp.le.s32.totalorder 2, %s17
      // Predicated region
      $region41: #{tpu_custom_call.1} parent=5 // pred_check
        %p245 = pneg %p244
      $region42: #{tpu_custom_call.1} parent=5 // pred_check_branch
        %247 = sbr.rel (%p245) target = $region44
      $region43: #{tpu_custom_call.1} parent=5 // pred_region
        %s248 = ssub.s32 %s17, 2
        // Predicated region
        $region45: #{tpu_custom_call.1} parent=43 // pred_check
          %p249 = pneg %p116
        $region46: #{tpu_custom_call.1} parent=43 // pred_check_branch
          %251 = sbr.rel (%p249) target = $region48
        $region47: #{tpu_custom_call.1} parent=43 // pred_region
          %s252 = sand.u32 %s101, 1
          %s253 = scalar_lea.sflag [#allocation4], %s252
          %s254 = sand.u32 %s101, 1
          %s255 = smul.addr %s254, 8
          %s256 = scalar_lea.vmem [#allocation7], %s255
          %257 = dma.done %s253, 128
        $region48: #{tpu_custom_call.1} parent=43 // pred_fallthru
          _
      $region44: #{tpu_custom_call.1} parent=5 // pred_fallthru
        _
    $region6: #{tpu_custom_call.1} parent=1 // loop_footer
      %s21 = sadd.s32 1, %s17
    $region7: #{tpu_custom_call.1} parent=1 // loop_footer_branch
      %16 = sbr.rel target = $region3
    $region8: #{tpu_custom_call.1} parent=1 // loop_exit
      _
    %258 = vsyncpa [#allocation3], 1
    %s259 = scalar_lea.sflag [#allocation3], 1
    %260 = vsyncpa %s259, 1
    %261 = vsyncpa [#allocation6], 1
    %s262 = scalar_lea.sflag [#allocation6], 1
    %263 = vsyncpa %s262, 1
    %264 = vsyncpa [#allocation4], 1
    %s265 = scalar_lea.sflag [#allocation4], 1
    %266 = vsyncpa %s265, 1

</llo_original>
